<compile_context>
chip_gen: v7x
topology: tpu7x:2x2x1
jax: 0.10.0
libtpu: 0.0.40
codegen_flags: <defaults>
</compile_context>

<pallas_src>
import functools

import jax
import jax.numpy as jnp
from jax.experimental import pallas as pl
from jax.experimental.pallas import tpu as pltpu


def cnn_layer_kernel(xcol_ref, w_ref, bias_ref, gamma_ref, beta_ref, o_ref, *,
                     N, HW, eps, neg_slope):
    """Fused conv (single MXU matmul over im2col) + batch-stat BN + LeakyReLU.

    xcol_ref:  (KKp, N*HW)   im2col slab, row r = (dy*k+dx)*Cin + ci (zero-padded rows)
    w_ref:     (Cout, KKp)   conv weights matching xcol's row ordering (zero-padded cols)
    bias_ref:  (Cout, 1)     conv bias
    gamma_ref: (Cout, 1)     BN weight
    beta_ref:  (Cout, 1)     BN bias
    o_ref:     (N, Cout, HW) output (NCHW with H,W flattened -> lane-dense stores)
    """
    # ---- convolution: one MXU matmul over the whole batch ----
    acc = jnp.dot(w_ref[...], xcol_ref[...],
                  preferred_element_type=jnp.float32)          # (Cout, N*HW)
    acc = acc + bias_ref[...]                                  # broadcast over lanes

    # ---- training-mode BatchNorm folded to per-channel scale/shift ----
    inv_count = 1.0 / float(N * HW)
    mean = jnp.sum(acc, axis=1, keepdims=True) * inv_count
    var = jnp.sum(acc * acc, axis=1, keepdims=True) * inv_count - mean * mean
    scale = gamma_ref[...] * jax.lax.rsqrt(var + eps)          # (Cout, 1)
    shift = beta_ref[...] - mean * scale                       # (Cout, 1)

    # ---- normalize + LeakyReLU, lane-dense stores ----
    y = acc * scale + shift
    y = jnp.where(y > 0, y, neg_slope * y).astype(o_ref.dtype)
    for n in range(N):
        # static lane slice at an offset that is a multiple of 128 (HW = 256) -> no
        # relayout, unmasked stores.
        o_ref[n] = y[:, n * HW:(n + 1) * HW]


def cnn_layer_forward(x_nchw, weight, conv_bias, gamma, beta, *,
                      filter_size=3, dilation_rate=1, eps=1e-5, negative_slope=0.01):
    """x_nchw: (N, Cin, H, W); weight: (Cout, Cin, k, k) (PyTorch layouts)."""
    N, Cin, H, W = x_nchw.shape
    Cout = weight.shape[0]
    k, d = filter_size, dilation_rate
    # NOTE: assumes odd filter_size (same assumption as the PyTorch module's usage).
    pad = d * (k - 1) // 2
    HW = H * W
    KK = k * k * Cin
    KKp = ((KK + 7) // 8) * 8          # pad contraction dim to a sublane multiple

    # Reflection pad directly in NCHW (pure index plumbing, outside the kernel).
    x_pad = jnp.pad(x_nchw, ((0, 0), (0, 0), (pad, pad), (pad, pad)),
                    mode="reflect").astype(jnp.float32)

    # im2col: xcol[(dy*k+dx)*Cin + ci, n*HW + h*W + x] = x_pad[n, ci, h + dy*d, x + dx*d]
    taps = jnp.stack([x_pad[:, :, dy * d:dy * d + H, dx * d:dx * d + W]
                      for dy in range(k) for dx in range(k)], axis=0)   # (k*k, N, Cin, H, W)
    xcol = jnp.transpose(taps, (0, 2, 1, 3, 4)).reshape(KK, N * HW)
    xcol = jnp.pad(xcol, ((0, KKp - KK), (0, 0)))                        # zero rows

    # (Cout, Cin, k, k) -> (Cout, (dy, dx, ci)) matching xcol's row ordering.
    w_mat = jnp.transpose(weight, (0, 2, 3, 1)).reshape(Cout, KK).astype(jnp.float32)
    w_mat = jnp.pad(w_mat, ((0, 0), (0, KKp - KK)))                      # zero cols

    kern = functools.partial(cnn_layer_kernel, N=N, HW=HW, eps=eps,
                             neg_slope=negative_slope)

    # TODO(synk): for large N*H*W, grid over lane blocks with per-block partial
    # sum / sum-of-squares scratch and a finalize phase instead of this
    # whole-batch-in-VMEM single-block design.
    out_flat = pl.pallas_call(
        kern,
        out_shape=jax.ShapeDtypeStruct((N, Cout, HW), x_nchw.dtype),
        in_specs=[
            pl.BlockSpec(memory_space=pltpu.MemorySpace.VMEM),  # xcol
            pl.BlockSpec(memory_space=pltpu.MemorySpace.VMEM),  # weights
            pl.BlockSpec(memory_space=pltpu.MemorySpace.VMEM),  # conv bias
            pl.BlockSpec(memory_space=pltpu.MemorySpace.VMEM),  # gamma
            pl.BlockSpec(memory_space=pltpu.MemorySpace.VMEM),  # beta
        ],
        out_specs=pl.BlockSpec(memory_space=pltpu.MemorySpace.VMEM),
        compiler_params=pltpu.CompilerParams(vmem_limit_bytes=32 * 1024 * 1024),
    )(xcol, w_mat,
      conv_bias.reshape(Cout, 1).astype(jnp.float32),
      gamma.reshape(Cout, 1).astype(jnp.float32),
      beta.reshape(Cout, 1).astype(jnp.float32))

    # (N, Cout, H*W) -> (N, Cout, H, W): free reshape, no transpose / relayout.
    return out_flat.reshape(N, Cout, H, W)


def _reference_forward(x_nchw, weight, conv_bias, gamma, beta,
                       *, filter_size=3, dilation_rate=1, eps=1e-5,
                       negative_slope=0.01):
    """Pure-JAX reference mirroring the PyTorch module (training-mode BN, with bias)."""
    k, d = filter_size, dilation_rate
    pad = d * (k - 1) // 2
    xp = jnp.pad(x_nchw, ((0, 0), (0, 0), (pad, pad), (pad, pad)), mode="reflect")
    y = jax.lax.conv_general_dilated(
        xp, weight, window_strides=(1, 1), padding="VALID",
        rhs_dilation=(d, d), dimension_numbers=("NCHW", "OIHW", "NCHW"))
    y = y + conv_bias.reshape(1, -1, 1, 1)
    mean = jnp.mean(y, axis=(0, 2, 3), keepdims=True)
    var = jnp.mean((y - mean) ** 2, axis=(0, 2, 3), keepdims=True)
    y_hat = (y - mean) / jnp.sqrt(var + eps)
    out = y_hat * gamma.reshape(1, -1, 1, 1) + beta.reshape(1, -1, 1, 1)
    return jnp.where(out > 0, out, negative_slope * out)


if __name__ == "__main__":
    # Small shapes consistent with the module: batch=2, in_ch=4, out_ch=8, spatial=16.
    N, Cin, Cout, H, W = 2, 4, 8, 16, 16
    filter_size, dilation_rate = 3, 1

    key = jax.random.PRNGKey(0)
    kx, kw, kb, kg, kbe = jax.random.split(key, 5)

    x = jax.random.normal(kx, (N, Cin, H, W), dtype=jnp.float32)
    weight = 0.1 * jax.random.normal(kw, (Cout, Cin, filter_size, filter_size),
                                     dtype=jnp.float32)
    conv_bias = 0.1 * jax.random.normal(kb, (Cout,), dtype=jnp.float32)
    gamma = 1.0 + 0.1 * jax.random.normal(kg, (Cout,), dtype=jnp.float32)
    beta = 0.1 * jax.random.normal(kbe, (Cout,), dtype=jnp.float32)

    out = cnn_layer_forward(x, weight, conv_bias, gamma, beta,
                            filter_size=filter_size, dilation_rate=dilation_rate)
    out = jax.block_until_ready(out)

    ref = _reference_forward(x, weight, conv_bias, gamma, beta,
                             filter_size=filter_size, dilation_rate=dilation_rate)
    assert out.shape == (N, Cout, H, W)
    assert jnp.allclose(out, ref, atol=1e-4, rtol=1e-4), (
        f"max abs err {jnp.max(jnp.abs(out - ref))}")

    print("KERNEL_OK")
</pallas_src>

<mosaic_0001>
module attributes {stable_mosaic.version = 11 : i64} {
  func.func @cnn_layer_kernel(%arg0: memref<40x512xf32, #tpu.memory_space<vmem>>, %arg1: memref<8x40xf32, #tpu.memory_space<vmem>>, %arg2: memref<8x1xf32, #tpu.memory_space<vmem>>, %arg3: memref<8x1xf32, #tpu.memory_space<vmem>>, %arg4: memref<8x1xf32, #tpu.memory_space<vmem>>, %arg5: memref<2x8x256xf32, #tpu.memory_space<vmem>>) attributes {dimension_semantics = [], scalar_prefetch = 0 : i64, scratch_operands = 0 : i64, tpu.core_type = #tpu.core_type<tc>} {
    %c0 = arith.constant 0 : index
    %c0_0 = arith.constant 0 : index
    %0 = vector.load %arg1[%c0, %c0_0] : memref<8x40xf32, #tpu.memory_space<vmem>>, vector<8x40xf32>
    %c0_1 = arith.constant 0 : index
    %c0_2 = arith.constant 0 : index
    %1 = vector.load %arg0[%c0_1, %c0_2] : memref<40x512xf32, #tpu.memory_space<vmem>>, vector<40x512xf32>
    %cst = arith.constant dense<0.000000e+00> : vector<8x512xf32>
    %2 = tpu.matmul %0, %1, %cst {dimension_numbers = #tpu.dot_dimension_numbers<[1], [0], [0], [1], [0, 0, 1, 1], [], []>} : vector<8x40xf32>, vector<40x512xf32>, vector<8x512xf32> -> vector<8x512xf32>
    %c0_3 = arith.constant 0 : index
    %c0_4 = arith.constant 0 : index
    %3 = vector.load %arg2[%c0_3, %c0_4] : memref<8x1xf32, #tpu.memory_space<vmem>>, vector<8x1xf32>
    %4 = vector.broadcast %3 : vector<8x1xf32> to vector<8x512xf32>
    %5 = arith.addf %2, %4 : vector<8x512xf32>
    %cst_5 = arith.constant dense<0.000000e+00> : vector<8xf32>
    %6 = vector.multi_reduction <add>, %5, %cst_5 [1] : vector<8x512xf32> to vector<8xf32>
    %7 = vector.shape_cast %6 : vector<8xf32> to vector<8x1xf32>
    %cst_6 = arith.constant 0.001953125 : f32
    %8 = vector.broadcast %cst_6 : f32 to vector<8x1xf32>
    %9 = arith.mulf %7, %8 : vector<8x1xf32>
    %10 = arith.mulf %5, %5 : vector<8x512xf32>
    %cst_7 = arith.constant dense<0.000000e+00> : vector<8xf32>
    %11 = vector.multi_reduction <add>, %10, %cst_7 [1] : vector<8x512xf32> to vector<8xf32>
    %12 = vector.shape_cast %11 : vector<8xf32> to vector<8x1xf32>
    %cst_8 = arith.constant 0.001953125 : f32
    %13 = vector.broadcast %cst_8 : f32 to vector<8x1xf32>
    %14 = arith.mulf %12, %13 : vector<8x1xf32>
    %15 = arith.mulf %9, %9 : vector<8x1xf32>
    %16 = arith.subf %14, %15 : vector<8x1xf32>
    %c0_9 = arith.constant 0 : index
    %c0_10 = arith.constant 0 : index
    %17 = vector.load %arg3[%c0_9, %c0_10] : memref<8x1xf32, #tpu.memory_space<vmem>>, vector<8x1xf32>
    %cst_11 = arith.constant 9.99999974E-6 : f32
    %18 = vector.broadcast %cst_11 : f32 to vector<8x1xf32>
    %19 = arith.addf %16, %18 : vector<8x1xf32>
    %20 = math.rsqrt %19 : vector<8x1xf32>
    %21 = arith.mulf %17, %20 : vector<8x1xf32>
    %c0_12 = arith.constant 0 : index
    %c0_13 = arith.constant 0 : index
    %22 = vector.load %arg4[%c0_12, %c0_13] : memref<8x1xf32, #tpu.memory_space<vmem>>, vector<8x1xf32>
    %23 = arith.mulf %9, %21 : vector<8x1xf32>
    %24 = arith.subf %22, %23 : vector<8x1xf32>
    %25 = vector.broadcast %21 : vector<8x1xf32> to vector<8x512xf32>
    %26 = arith.mulf %5, %25 : vector<8x512xf32>
    %27 = vector.broadcast %24 : vector<8x1xf32> to vector<8x512xf32>
    %28 = arith.addf %26, %27 : vector<8x512xf32>
    %cst_14 = arith.constant 0.000000e+00 : f32
    %29 = vector.broadcast %cst_14 : f32 to vector<8x512xf32>
    %30 = arith.cmpf ogt, %28, %29 : vector<8x512xf32>
    %cst_15 = arith.constant 0.00999999977 : f32
    %31 = vector.broadcast %cst_15 : f32 to vector<8x512xf32>
    %32 = arith.mulf %31, %28 : vector<8x512xf32>
    %33 = arith.select %30, %28, %32 : vector<8x512xi1>, vector<8x512xf32>
    %34 = vector.extract_strided_slice %33 {offsets = [0, 0], sizes = [8, 256], strides = [1, 1]} : vector<8x512xf32> to vector<8x256xf32>
    %c0_16 = arith.constant 0 : index
    %c0_17 = arith.constant 0 : index
    %c0_18 = arith.constant 0 : index
    %35 = vector.load %arg5[%c0_16, %c0_17, %c0_18] : memref<2x8x256xf32, #tpu.memory_space<vmem>>, vector<1x8x256xf32>
    %36 = vector.shape_cast %35 : vector<1x8x256xf32> to vector<8x256xf32>
    %37 = vector.shape_cast %34 : vector<8x256xf32> to vector<1x8x256xf32>
    tpu.vector_store %arg5[%c0_16, %c0_17, %c0_18], %37 {strides = array<i32>} : memref<2x8x256xf32, #tpu.memory_space<vmem>>, vector<1x8x256xf32>,
    %38 = vector.extract_strided_slice %33 {offsets = [0, 256], sizes = [8, 256], strides = [1, 1]} : vector<8x512xf32> to vector<8x256xf32>
    %c1 = arith.constant 1 : index
    %c0_19 = arith.constant 0 : index
    %c0_20 = arith.constant 0 : index
    %39 = vector.load %arg5[%c1, %c0_19, %c0_20] : memref<2x8x256xf32, #tpu.memory_space<vmem>>, vector<1x8x256xf32>
    %40 = vector.shape_cast %39 : vector<1x8x256xf32> to vector<8x256xf32>
    %41 = vector.shape_cast %38 : vector<8x256xf32> to vector<1x8x256xf32>
    tpu.vector_store %arg5[%c1, %c0_19, %c0_20], %41 {strides = array<i32>} : memref<2x8x256xf32, #tpu.memory_space<vmem>>, vector<1x8x256xf32>,
    return
  }
}

</mosaic_0001>

<llo_original>
// kernel: tpu_custom_call.1
$region0: #{tpu_custom_call.1}
  #allocation0 [shape = 'u32[]', space=smem, size = 0x4, offset = 0x4, fixed_abs, tag = 'smem constant byte address 0x4 - core index']
  #allocation1 [shape = 'u32[144,128]{1,0:T(1,128)}', space=vmem, size = 0x12000, scoped, tag = 'internal scratch']
  %s0 = inlined_call_operand.hbm [shape: f32[40,512], index: 0, kind: input, shape index: {}]
  %s1 = inlined_call_operand.vmem [shape: f32[8,40], index: 1, kind: input, shape index: {}]
  %s2 = inlined_call_operand.vmem [shape: f32[8,1], index: 2, kind: input, shape index: {}]
  %s3 = inlined_call_operand.vmem [shape: f32[8,1], index: 3, kind: input, shape index: {}]
  %s4 = inlined_call_operand.vmem [shape: f32[8,1], index: 4, kind: input, shape index: {}]
  %s5 = inlined_call_operand.hbm [shape: f32[2,8,256], index: 5, kind: output, shape index: {}]
  %s6 = sld [smem:[#allocation0]]
  $region34: #{tpu_custom_call.1} parent=0
    _
  %s8 = ssub.s32 1, %s6
  %s9 = scalar_select 0, %s8, %s6
  $region1: #{tpu_custom_call.1} parent=0
    #allocation2 [shape = 'u8[81920]{0}', space=vmem, size = 0x14000, scoped, tag = 'input window, operand 0, single buffered']
    #allocation3 [shape = 's32[1]{0}', space=sflag, size = 0x4, scoped, tag = 'scoped memory for tpu_custom_call.1']
    #allocation4 [shape = 's32[1]{0}', space=sflag, size = 0x4, scoped, tag = 'scoped memory for tpu_custom_call.1']
    #allocation5 [shape = 'u8[16384]{0}', space=vmem, size = 0x4000, scoped, tag = 'output window, operand 0, single buffered']
    %10 = vsyncpa [#allocation3], 0
    %11 = vsyncpa [#allocation4], 0
    // Predicated region
    $region2: #{tpu_custom_call.1} parent=1 // pred_check
      _
    $region3: #{tpu_custom_call.1} parent=1 // pred_check_branch
      %13 = sbr.rel (0) target = $region5
    $region4: #{tpu_custom_call.1} parent=1 // pred_region
      %s15 = ssub.s32 2560, 2560
      %16 = vsyncadd [#allocation3], %s15
      %s17 = sshll.u32 [#allocation2], 4
      %s18 = int_to_ptr.vmem [resolvable:$true] %s17
      %23 = dma.hbm_to_vmem [thread:$0]  %s0, 2560, %s18, [#allocation3], 512, 512, 32
    $region5: #{tpu_custom_call.1} parent=1 // pred_fallthru
      _
    // Predicated region
    $region6: #{tpu_custom_call.1} parent=1 // pred_check
      _
    $region7: #{tpu_custom_call.1} parent=1 // pred_check_branch
      %25 = sbr.rel (0) target = $region9
    $region8: #{tpu_custom_call.1} parent=1 // pred_region
      _
    $region9: #{tpu_custom_call.1} parent=1 // pred_fallthru
      _
    // Predicated region
    $region10: #{tpu_custom_call.1} parent=1 // pred_check
      _
    $region11: #{tpu_custom_call.1} parent=1 // pred_check_branch
      %27 = sbr.rel (0) target = $region13
    $region12: #{tpu_custom_call.1} parent=1 // pred_region
      _
    $region13: #{tpu_custom_call.1} parent=1 // pred_fallthru
      _
    // Predicated region
    $region14: #{tpu_custom_call.1} parent=1 // pred_check
      _
    $region15: #{tpu_custom_call.1} parent=1 // pred_check_branch
      %29 = sbr.rel (0) target = $region17
    $region16: #{tpu_custom_call.1} parent=1 // pred_region
      _
    $region17: #{tpu_custom_call.1} parent=1 // pred_fallthru
      _
    // Predicated region
    $region18: #{tpu_custom_call.1} parent=1 // pred_check
      _
    $region19: #{tpu_custom_call.1} parent=1 // pred_check_branch
      %31 = sbr.rel (0) target = $region21
    $region20: #{tpu_custom_call.1} parent=1 // pred_region
      _
    $region21: #{tpu_custom_call.1} parent=1 // pred_fallthru
      _
    // Predicated region
    $region22: #{tpu_custom_call.1} parent=1 // pred_check
      _
    $region23: #{tpu_custom_call.1} parent=1 // pred_check_branch
      %33 = sbr.rel (0) target = $region25
    $region24: #{tpu_custom_call.1} parent=1 // pred_region
      %34 = dma.done [#allocation3], 2560
    $region25: #{tpu_custom_call.1} parent=1 // pred_fallthru
      _
    %v35 = vld [vmem:[%s1] sm:$0xff]
    %v36 = vld [vmem:[#allocation2] sm:$0xff]
    %v37 = vld [vmem:[#allocation2 + $0x8] sm:$0xff]
    %v38 = vld [vmem:[#allocation2 + $0x10] sm:$0xff]
    %v39 = vld [vmem:[#allocation2 + $0x18] sm:$0xff]
    %v40 = vld [vmem:[#allocation2 + $0x20] sm:$0xff]
    %v41 = vld [vmem:[#allocation2 + $0x28] sm:$0xff]
    %v42 = vld [vmem:[#allocation2 + $0x30] sm:$0xff]
    %v43 = vld [vmem:[#allocation2 + $0x38] sm:$0xff]
    %v44 = vld [vmem:[#allocation2 + $0x40] sm:$0xff]
    %v45 = vld [vmem:[#allocation2 + $0x48] sm:$0xff]
    %v46 = vld [vmem:[#allocation2 + $0x50] sm:$0xff]
    %v47 = vld [vmem:[#allocation2 + $0x58] sm:$0xff]
    %v48 = vld [vmem:[#allocation2 + $0x60] sm:$0xff]
    %v49 = vld [vmem:[#allocation2 + $0x68] sm:$0xff]
    %v50 = vld [vmem:[#allocation2 + $0x70] sm:$0xff]
    %v51 = vld [vmem:[#allocation2 + $0x78] sm:$0xff]
    %v52 = vld [vmem:[#allocation2 + $0x80] sm:$0xff]
    %v53 = vld [vmem:[#allocation2 + $0x88] sm:$0xff]
    %v54 = vld [vmem:[#allocation2 + $0x90] sm:$0xff]
    %v55 = vld [vmem:[#allocation2 + $0x98] sm:$0xff]
    %v56 = vld [vmem:[%s2] sm:$0xff]
    %58 = vset.pattern.permute.xlu0 0
    %59 = vperm.xlu0 %58, %v56
    %v60 = vpop.permute.xlu0 %59
    %vm62 = vcmask 326656
    %v64 = vsel %vm62, %v35, 0
    %66 = vmatprep.subr.mxu0 %v37
    %67 = vmatpush1.msra.mxu0 %v36
    %68 = vmatprep.subr.mxu0 %v41
    %69 = vmatpush1.msra.mxu0 %v40
    %70 = vmatprep.subr.mxu0 %v45
    %71 = vmatpush1.msra.mxu0 %v44
    %72 = vmatprep.subr.mxu0 %v49
    %73 = vmatpush1.msra.mxu0 %v48
    %74 = vmatprep.subr.mxu0 %v53
    %75 = vmatpush1.msra.mxu0 %v52
    %76 = vmatprep.subr.mxu0 0.0
    %77 = vmatpush1.msra.mxu0 0.0
    %78 = vmatprep.subr.mxu0 0.0
    %79 = vmatpush1.msra.mxu0 0.0
    %80 = vmatprep.subr.mxu0 0.0
    %81 = vmatpush1.msra.mxu0 0.0
    %82 = vmatprep.subr.mxu0 0.0
    %83 = vmatpush1.msra.mxu0 0.0
    %84 = vmatprep.subr.mxu0 0.0
    %85 = vmatpush1.msra.mxu0 0.0
    %86 = vmatprep.subr.mxu0 0.0
    %87 = vmatpush1.msra.mxu0 0.0
    %88 = vmatprep.subr.mxu0 0.0
    %89 = vmatpush1.msra.mxu0 0.0
    %90 = vmatprep.subr.mxu0 0.0
    %91 = vmatpush1.msra.mxu0 0.0
    %92 = vmatprep.subr.mxu0 0.0
    %93 = vmatpush1.msra.mxu0 0.0
    %94 = vmatprep.subr.mxu0 0.0
    %95 = vmatpush1.msra.mxu0 0.0
    %96 = vmatprep.subr.mxu0 0.0
    %97 = vmatpush1.msra.mxu0 0.0
    %98 = vmatprep.subr.mxu0 0.0
    %99 = vmatpush1.msra.mxu0 0.0
    %100 = vmatprep.subr.mxu0 0.0
    %101 = vmatpush1.msra.mxu0 0.0
    %102 = vmatprep.subr.mxu0 0.0
    %103 = vmatpush1.msra.mxu0 0.0
    %104 = vmatprep.subr.mxu0 0.0
    %105 = vmatpush1.msra.mxu0 0.0
    %106 = vmatprep.subr.mxu0 0.0
    %107 = vmatpush1.msra.mxu0 0.0
    %108 = vmatprep.subr.mxu0 0.0
    %109 = vmatpush1.msra.mxu0 0.0
    %110 = vmatprep.subr.mxu0 0.0
    %111 = vmatpush1.msra.mxu0 0.0
    %112 = vmatprep.subr.mxu0 0.0
    %113 = vmatpush1.msra.mxu0 0.0
    %114 = vmatprep.subr.mxu0 0.0
    %115 = vmatpush1.msra.mxu0 0.0
    %116 = vmatprep.subr.mxu0 0.0
    %117 = vmatpush1.msra.mxu0 0.0
    %118 = vmatprep.subr.mxu0 0.0
    %119 = vmatpush1.msra.mxu0 0.0
    %120 = vmatprep.subr.mxu0 0.0
    %121 = vmatpush1.msra.mxu0 0.0
    %122 = vmatprep.subr.mxu0 0.0
    %123 = vmatpush1.msra.mxu0 0.0
    %124 = vmatprep.subr.mxu0 0.0
    %125 = vmatpush1.msra.mxu0 0.0
    %126 = vmatprep.subr.mxu0 0.0
    %127 = vmatpush1.msra.mxu0 0.0
    %128 = vmatprep.subr.mxu0 0.0
    %129 = vmatpush1.msra.mxu0 0.0
    %130 = vmatprep.mubr.f32.mxu0 0.0
    %131 = vmatmul.mubr.f32.gmra.mrb[0].mxu0 %v64
    %v132 = vpop.f32.mrb[0].mxu0
    %v133 = vadd.f32 %v60, %v132
    %v134 = vpop.f32.mrb[0].mxu0
    %v135 = vadd.f32 %v60, %v134
    %136 = vdwg.mxu0
    %137 = vmatprep.subr.mxu0 %v39
    %138 = vmatpush1.msra.mxu0 %v38
    %139 = vmatprep.subr.mxu0 %v43
    %140 = vmatpush1.msra.mxu0 %v42
    %141 = vmatprep.subr.mxu0 %v47
    %142 = vmatpush1.msra.mxu0 %v46
    %143 = vmatprep.subr.mxu0 %v51
    %144 = vmatpush1.msra.mxu0 %v50
    %145 = vmatprep.subr.mxu0 %v55
    %146 = vmatpush1.msra.mxu0 %v54
    %147 = vmatprep.subr.mxu0 0.0
    %148 = vmatpush1.msra.mxu0 0.0
    %149 = vmatprep.subr.mxu0 0.0
    %150 = vmatpush1.msra.mxu0 0.0
    %151 = vmatprep.subr.mxu0 0.0
    %152 = vmatpush1.msra.mxu0 0.0
    %153 = vmatprep.subr.mxu0 0.0
    %154 = vmatpush1.msra.mxu0 0.0
    %155 = vmatprep.subr.mxu0 0.0
    %156 = vmatpush1.msra.mxu0 0.0
    %157 = vmatprep.subr.mxu0 0.0
    %158 = vmatpush1.msra.mxu0 0.0
    %159 = vmatprep.subr.mxu0 0.0
    %160 = vmatpush1.msra.mxu0 0.0
    %161 = vmatprep.subr.mxu0 0.0
    %162 = vmatpush1.msra.mxu0 0.0
    %163 = vmatprep.subr.mxu0 0.0
    %164 = vmatpush1.msra.mxu0 0.0
    %165 = vmatprep.subr.mxu0 0.0
    %166 = vmatpush1.msra.mxu0 0.0
    %167 = vmatprep.subr.mxu0 0.0
    %168 = vmatpush1.msra.mxu0 0.0
    %169 = vmatprep.subr.mxu0 0.0
    %170 = vmatpush1.msra.mxu0 0.0
    %171 = vmatprep.subr.mxu0 0.0
    %172 = vmatpush1.msra.mxu0 0.0
    %173 = vmatprep.subr.mxu0 0.0
    %174 = vmatpush1.msra.mxu0 0.0
    %175 = vmatprep.subr.mxu0 0.0
    %176 = vmatpush1.msra.mxu0 0.0
    %177 = vmatprep.subr.mxu0 0.0
    %178 = vmatpush1.msra.mxu0 0.0
    %179 = vmatprep.subr.mxu0 0.0
    %180 = vmatpush1.msra.mxu0 0.0
    %181 = vmatprep.subr.mxu0 0.0
    %182 = vmatpush1.msra.mxu0 0.0
    %183 = vmatprep.subr.mxu0 0.0
    %184 = vmatpush1.msra.mxu0 0.0
    %185 = vmatprep.subr.mxu0 0.0
    %186 = vmatpush1.msra.mxu0 0.0
    %187 = vmatprep.subr.mxu0 0.0
    %188 = vmatpush1.msra.mxu0 0.0
    %189 = vmatprep.subr.mxu0 0.0
    %190 = vmatpush1.msra.mxu0 0.0
    %191 = vmatprep.subr.mxu0 0.0
    %192 = vmatpush1.msra.mxu0 0.0
    %193 = vmatprep.subr.mxu0 0.0
    %194 = vmatpush1.msra.mxu0 0.0
    %195 = vmatprep.subr.mxu0 0.0
    %196 = vmatpush1.msra.mxu0 0.0
    %197 = vmatprep.subr.mxu0 0.0
    %198 = vmatpush1.msra.mxu0 0.0
    %199 = vmatprep.subr.mxu0 0.0
    %200 = vmatpush1.msra.mxu0 0.0
    %201 = vmatprep.mubr.f32.mxu0 0.0
    %202 = vmatmul.mubr.f32.gmra.mrb[0].mxu0 %v64
    %v203 = vpop.f32.mrb[0].mxu0
    %v204 = vadd.f32 %v60, %v203
    %v205 = vpop.f32.mrb[0].mxu0
    %v206 = vadd.f32 %v60, %v205
    %207 = vdwg.mxu0
    %v208 = vadd.f32 %v133, %v135
    %v209 = vadd.f32 %v208, %v204
    %v210 = vadd.f32 %v209, %v206
    %211 = vadd.xlane.f32.xlu0 %v210
    %v212 = vpop.xlane.xlu0 %211
    %v213 = vmul.f32 %v212, 0.001953125
    %v214 = vmul.f32 %v133, %v133
    %v215 = vmul.f32 %v135, %v135
    %v216 = vmul.f32 %v204, %v204
    %v217 = vmul.f32 %v206, %v206
    %v218 = vadd.f32 %v214, %v215
    %v219 = vadd.f32 %v218, %v216
    %v220 = vadd.f32 %v219, %v217
    %221 = vadd.xlane.f32.xlu0 %v220
    %v222 = vpop.xlane.xlu0 %221
    %v223 = vmul.f32 %v222, 0.001953125
    %v224 = vmul.f32 %v213, %v213
    %v225 = vsub.f32 %v223, %v224
    %v226 = vld [vmem:[%s3] sm:$0xff]
    %v227 = vadd.f32 %v225, 1e-05
    %v228 = vrsqrt.pop %v227
    %v229 = vmul.f32 %v226, %v228
    %v230 = vld [vmem:[%s4] sm:$0xff]
    %v231 = vmul.f32 %v213, %v229
    %v232 = vsub.f32 %v230, %v231
    %234 = vset.pattern.permute.xlu0 0
    %235 = vperm.xlu0 %234, %v229
    %v236 = vpop.permute.xlu0 %235
    %v238 = vmul.f32 %v133, %v236
    %v239 = vmul.f32 %v135, %v236
    %v240 = vmul.f32 %v204, %v236
    %v241 = vmul.f32 %v206, %v236
    %243 = vset.pattern.permute.xlu0 0
    %244 = vperm.xlu0 %243, %v232
    %v245 = vpop.permute.xlu0 %244
    %v247 = vadd.f32 %v238, %v245
    %v248 = vadd.f32 %v239, %v245
    %v249 = vadd.f32 %v240, %v245
    %v250 = vadd.f32 %v241, %v245
    %vm251 = vcmp.gt.f32.partialorder %v247, 0.0
    %vm252 = vcmp.gt.f32.partialorder %v248, 0.0
    %vm253 = vcmp.gt.f32.partialorder %v249, 0.0
    %vm254 = vcmp.gt.f32.partialorder %v250, 0.0
    %v255 = vmul.f32 %v247, 0.01
    %v256 = vmul.f32 %v248, 0.01
    %v257 = vmul.f32 %v249, 0.01
    %v258 = vmul.f32 %v250, 0.01
    %v259 = vsel %vm251, %v247, %v255
    %v260 = vsel %vm252, %v248, %v256
    %v261 = vsel %vm253, %v249, %v257
    %v262 = vsel %vm254, %v250, %v258
    %263 = vst [vmem:[#allocation5] sm:$0xff] %v259
    %264 = vst [vmem:[#allocation5 + $0x8] sm:$0xff] %v260
    %s265 = scalar_lea.vmem [#allocation5], 16
    %266 = vst [vmem:[%s265] sm:$0xff] %v261
    %267 = vst [vmem:[%s265 + $0x8] sm:$0xff] %v262
    // Predicated region
    $region26: #{tpu_custom_call.1} parent=1 // pred_check
      _
    $region27: #{tpu_custom_call.1} parent=1 // pred_check_branch
      %269 = sbr.rel (0) target = $region29
    $region28: #{tpu_custom_call.1} parent=1 // pred_region
      %s271 = ssub.s32 512, 512
      %272 = vsyncadd [#allocation4], %s271
      %s273 = sshll.u32 [#allocation5], 4
      %s274 = int_to_ptr.vmem [resolvable:$true] %s273
      %279 = dma.vmem_to_hbm [thread:$0]  %s274, 512, %s5, [#allocation4], 256, 256, 16
    $region29: #{tpu_custom_call.1} parent=1 // pred_fallthru
      _
    // Predicated region
    $region30: #{tpu_custom_call.1} parent=1 // pred_check
      _
    $region31: #{tpu_custom_call.1} parent=1 // pred_check_branch
      %281 = sbr.rel (0) target = $region33
    $region32: #{tpu_custom_call.1} parent=1 // pred_region
      %282 = dma.done [#allocation4], 512
    $region33: #{tpu_custom_call.1} parent=1 // pred_fallthru
      _
    %283 = vsyncpa [#allocation3], 1
    %284 = vsyncpa [#allocation4], 1

</llo_original>
